<compile_context>
chip_gen: v7x
topology: tpu7x:2x2x1
jax: 0.10.0
libtpu: 0.0.40
codegen_flags: <defaults>
</compile_context>

<pallas_src>
import jax
import jax.numpy as jnp
from jax.experimental import pallas as pl
from jax.experimental.pallas import tpu as pltpu

KH = KW = 3  # kernel_size=3 (module default); stride=1, padding=1, dilation=1, groups=1


def conv_bn_relu_kernel(lhs_ref, b_ref, o_ref):
    """Fused Conv(3x3) + BN(eval) + ReLU as one MXU dot + ReLU epilogue.

    lhs_ref: (row_tile, K_pad)     im2col rows: [band kh=0 | kh=1 | kh=2 | 1.0 | zeros]
    b_ref:   (K_pad, Nout_pad)     banded conv weights with BN scale folded in and the
                                   BN shift as the bias K-row; zero K/N padding.
    o_ref:   (row_tile, Nout_pad)  lane-dense output slab.
    """
    acc = jnp.dot(lhs_ref[...], b_ref[...], preferred_element_type=jnp.float32)
    o_ref[...] = jnp.maximum(acc, 0.0).astype(o_ref.dtype)


def _pick_row_tile(total_rows, max_tile=512):
    """>=2 grid blocks when possible (v7x: 2 TCs + DMA/compute overlap), else one tile."""
    tile = pl.cdiv(total_rows, 2) if total_rows >= 16 else total_rows
    tile = min(tile, max_tile)
    return max(8, pl.cdiv(tile, 8) * 8)


def _fold_bn_and_band_weights(w_oihw, gamma, beta, running_mean, running_var, eps,
                              W, k_pad, nout_pad):
    """Fold inference BN into the conv weights, band over kw, append the shift bias row.

    Returns b2d: (k_pad, nout_pad) with
      b2d[(kh*(W+2)+w2)*Cin+ci, w*Cout+co] = scale[co]*w[co,ci,kh,w2-w]  if 0<=w2-w<KW
      b2d[KH*(W+2)*Cin,          w*Cout+co] = beta[co] - mean[co]*scale[co]   (bias row)
      remaining rows / columns zero.
    """
    Cout, Cin, kh_, kw_ = w_oihw.shape
    inv_std = jax.lax.rsqrt(running_var.astype(jnp.float32) + eps)
    scale = gamma.astype(jnp.float32) * inv_std                        # (Cout,)
    shift = beta.astype(jnp.float32) - running_mean.astype(jnp.float32) * scale

    w_hwio = jnp.transpose(w_oihw.astype(jnp.float32), (2, 3, 1, 0))   # (KH,KW,Cin,Cout)
    wf = w_hwio * scale[None, None, None, :]                           # BN scale folded in

    w2 = jnp.arange(W + 2)[:, None]            # padded column position
    wo = jnp.arange(W)[None, :]                # output column position
    kw = w2 - wo                               # (W+2, W)
    mask = (kw >= 0) & (kw < kw_)
    kwc = jnp.clip(kw, 0, kw_ - 1)

    b = wf[:, kwc, :, :]                                   # (KH, W+2, W, Cin, Cout)
    b = jnp.transpose(b, (0, 1, 3, 2, 4))                  # (KH, W+2, Cin, W, Cout)
    b = jnp.where(mask[None, :, None, :, None], b, 0.0)
    b = b.reshape(kh_ * (W + 2) * Cin, W * Cout)           # (K_data, W*Cout)

    k_data = b.shape[0]
    shift_row = jnp.tile(shift, W)[None, :]                # bias row paired with the 1-lane
    b = jnp.concatenate(
        [b, shift_row, jnp.zeros((k_pad - k_data - 1, W * Cout), jnp.float32)], axis=0)
    if nout_pad > W * Cout:
        b = jnp.pad(b, ((0, 0), (0, nout_pad - W * Cout)))
    return b


def conv_bn_relu_nhwc(x_nhwc, w_oihw, gamma, beta, running_mean, running_var,
                      eps=1e-5, mxu_dtype=jnp.bfloat16):
    """Core fused op. x_nhwc: (N, H, W, Cin) -> (N, H, W, Cout)."""
    N, H, W, Cin = x_nhwc.shape
    Cout, cin_w, kh_, kw_ = w_oihw.shape
    assert (kh_, kw_) == (KH, KW) and cin_w == Cin, (
        "kernel hard-codes kernel_size=3, stride=1, padding=1, dilation=1, groups=1")

    k_data = KH * (W + 2) * Cin                    # 216 for this toy shape
    k_pad = pl.cdiv(k_data + 1, 128) * 128         # +1 bias lane -> 256 (one MXU pass)
    nout = W * Cout                                # 128 here
    nout_pad = pl.cdiv(nout, 128) * 128            # lane-dense output slab

    # ---- wrapper-side im2col (XLA fuses pad + slice + concat; input read once) ----
    x_pad = jnp.pad(x_nhwc, ((0, 0), (1, 1), (1, 1), (0, 0)))          # padding=1
    x_rows = x_pad.reshape(N, H + 2, (W + 2) * Cin)
    bands = [x_rows[:, kh:kh + H, :] for kh in range(KH)]              # 3 x (N,H,(W+2)*Cin)
    lhs = jnp.concatenate(
        bands
        + [jnp.ones((N, H, 1), x_nhwc.dtype),                          # bias lane (BN shift)
           jnp.zeros((N, H, k_pad - k_data - 1), x_nhwc.dtype)],
        axis=-1)                                                        # (N, H, k_pad)
    total_rows = N * H
    lhs2d = lhs.reshape(total_rows, k_pad)

    row_tile = _pick_row_tile(total_rows)
    rows_pad = pl.cdiv(total_rows, row_tile) * row_tile
    if rows_pad > total_rows:
        lhs2d = jnp.pad(lhs2d, ((0, rows_pad - total_rows), (0, 0)))

    b2d = _fold_bn_and_band_weights(
        w_oihw, gamma, beta, running_mean, running_var, eps, W, k_pad, nout_pad)

    # bf16 MXU operands (native on v5e/v6e/v7x), f32 accumulation inside the kernel.
    lhs2d = lhs2d.astype(mxu_dtype)
    b2d = b2d.astype(mxu_dtype)

    grid = (rows_pad // row_tile,)
    out2d = pl.pallas_call(
        conv_bn_relu_kernel,
        out_shape=jax.ShapeDtypeStruct((rows_pad, nout_pad), x_nhwc.dtype),
        grid=grid,
        in_specs=[
            pl.BlockSpec((row_tile, k_pad), lambda i: (i, 0)),
            pl.BlockSpec((k_pad, nout_pad), lambda i: (0, 0)),
        ],
        out_specs=pl.BlockSpec((row_tile, nout_pad), lambda i: (i, 0)),
        compiler_params=pltpu.CompilerParams(
            dimension_semantics=("parallel",)),
    )(lhs2d, b2d)

    return out2d[:total_rows, :nout].reshape(N, H, W, Cout)


def conv_bn_relu(x_nchw, w_oihw, gamma, beta, running_mean, running_var, eps=1e-5):
    """PyTorch-facing NCHW adapter. x_nchw: (N, Cin, H, W) -> (N, Cout, H, W)."""
    # TODO(synk): accepting/producing NHWC at the module boundary (and fusing this final
    # transpose into the consumer) would remove these two HBM round trips entirely.
    x_nhwc = jnp.transpose(x_nchw, (0, 2, 3, 1))
    out_nhwc = conv_bn_relu_nhwc(x_nhwc, w_oihw, gamma, beta,
                                 running_mean, running_var, eps)
    return jnp.transpose(out_nhwc, (0, 3, 1, 2))


def reference(x_nchw, w_oihw, gamma, beta, running_mean, running_var, eps=1e-5):
    """Pure-JAX f32 reference (lax conv + BN(eval) + ReLU) for correctness checking."""
    y = jax.lax.conv_general_dilated(
        x_nchw.astype(jnp.float32), w_oihw.astype(jnp.float32),
        window_strides=(1, 1), padding=((1, 1), (1, 1)),
        dimension_numbers=("NCHW", "OIHW", "NCHW"),
        precision=jax.lax.Precision.HIGHEST)
    inv_std = 1.0 / jnp.sqrt(running_var + eps)
    scale = (gamma * inv_std)[None, :, None, None]
    shift = (beta - running_mean * gamma * inv_std)[None, :, None, None]
    return jnp.maximum(y * scale + shift, 0.0)


if __name__ == "__main__":
    # Module config: in_channels=4, out_channels=8, k=3, s=1, p=1, has_bias=False
    N, Cin, Cout, H, W = 2, 4, 8, 16, 16

    key = jax.random.PRNGKey(0)
    kx, kw_key, kg, kb, km, kv = jax.random.split(key, 6)

    x = jax.random.normal(kx, (N, Cin, H, W), jnp.float32)
    w = jax.random.normal(kw_key, (Cout, Cin, KH, KW), jnp.float32) * 0.1
    # BatchNorm parameters (inference / running-stats mode).
    gamma = 1.0 + 0.1 * jax.random.normal(kg, (Cout,), jnp.float32)
    beta = 0.1 * jax.random.normal(kb, (Cout,), jnp.float32)
    running_mean = 0.1 * jax.random.normal(km, (Cout,), jnp.float32)
    running_var = 1.0 + 0.1 * jax.random.uniform(kv, (Cout,), jnp.float32)

    out = conv_bn_relu(x, w, gamma, beta, running_mean, running_var)
    out = jax.block_until_ready(out)

    ref = reference(x, w, gamma, beta, running_mean, running_var)
    assert out.shape == (N, Cout, H, W), out.shape
    # bf16 MXU operands with f32 accumulation -> compare against the full-f32 reference
    # with a correspondingly relaxed tolerance (pass mxu_dtype=jnp.float32 for tighter).
    max_err = float(jnp.max(jnp.abs(out - ref)))
    assert jnp.allclose(out, ref, atol=2e-2, rtol=2e-2), max_err

    print("KERNEL_OK")
</pallas_src>

<mosaic_0001>
module attributes {stable_mosaic.version = 11 : i64} {
  func.func @conv_bn_relu_kernel(%arg0: i32, %arg1: memref<16x256xbf16, #tpu.memory_space<vmem>>, %arg2: memref<256x128xbf16, #tpu.memory_space<vmem>>, %arg3: memref<16x128xf32, #tpu.memory_space<vmem>>) attributes {dimension_semantics = [#tpu.dimension_semantics<parallel>], iteration_bounds = array<i64: 2>, scalar_prefetch = 0 : i64, scratch_operands = 0 : i64, tpu.core_type = #tpu.core_type<tc>, window_params = [{transform_indices = @transform_0, window_bounds = array<i64: 16, 256>}, {pipeline_mode = #tpu.pipeline_mode<synchronous>, transform_indices = @transform_1, window_bounds = array<i64: 256, 128>}, {transform_indices = @transform_2, window_bounds = array<i64: 16, 128>}]} {
    %c0 = arith.constant 0 : index
    %c0_0 = arith.constant 0 : index
    %0 = vector.load %arg1[%c0, %c0_0] : memref<16x256xbf16, #tpu.memory_space<vmem>>, vector<16x256xbf16>
    %c0_1 = arith.constant 0 : index
    %c0_2 = arith.constant 0 : index
    %1 = vector.load %arg2[%c0_1, %c0_2] : memref<256x128xbf16, #tpu.memory_space<vmem>>, vector<256x128xbf16>
    %cst = arith.constant dense<0.000000e+00> : vector<16x128xf32>
    %2 = tpu.matmul %0, %1, %cst {dimension_numbers = #tpu.dot_dimension_numbers<[1], [0], [0], [1], [0, 0, 1, 1], [], []>} : vector<16x256xbf16>, vector<256x128xbf16>, vector<16x128xf32> -> vector<16x128xf32>
    %cst_3 = arith.constant 0.000000e+00 : f32
    %3 = vector.broadcast %cst_3 : f32 to vector<16x128xf32>
    %4 = arith.maximumf %2, %3 : vector<16x128xf32>
    %c0_4 = arith.constant 0 : index
    %c0_5 = arith.constant 0 : index
    %5 = vector.load %arg3[%c0_4, %c0_5] : memref<16x128xf32, #tpu.memory_space<vmem>>, vector<16x128xf32>
    tpu.vector_store %arg3[%c0_4, %c0_5], %4 {strides = array<i32>} : memref<16x128xf32, #tpu.memory_space<vmem>>, vector<16x128xf32>,
    return
  }
  func.func @transform_0(%arg0: i32) -> (i32, i32) {
    %c0_i32 = arith.constant 0 : i32
    %c0_i32_0 = arith.constant 0 : i32
    return %arg0, %c0_i32 : i32, i32
  }
  func.func @transform_1(%arg0: i32) -> (i32, i32) {
    %c0_i32 = arith.constant 0 : i32
    %c0_i32_0 = arith.constant 0 : i32
    %c0_i32_1 = arith.constant 0 : i32
    return %c0_i32, %c0_i32_0 : i32, i32
  }
  func.func @transform_2(%arg0: i32) -> (i32, i32) {
    %c0_i32 = arith.constant 0 : i32
    %c0_i32_0 = arith.constant 0 : i32
    return %arg0, %c0_i32 : i32, i32
  }
}

</mosaic_0001>

<llo_original>
// kernel: tpu_custom_call.1
$region0: #{tpu_custom_call.1}
  #allocation0 [shape = 'u32[]', space=smem, size = 0x4, offset = 0x4, fixed_abs, tag = 'smem constant byte address 0x4 - core index']
  #allocation1 [shape = 'u32[144,128]{1,0:T(1,128)}', space=vmem, size = 0x12000, scoped, tag = 'internal scratch']
  %s0 = inlined_call_operand.hbm [shape: bf16[32,256], index: 0, kind: input, shape index: {}]
  %s1 = inlined_call_operand.hbm [shape: bf16[256,128], index: 1, kind: input, shape index: {}]
  %s2 = inlined_call_operand.hbm [shape: f32[32,128], index: 2, kind: output, shape index: {}]
  %s3 = sld [smem:[#allocation0]]
  $region49: #{tpu_custom_call.1} parent=0
    _
  %s5 = ssub.s32 1, %s3
  %s6 = scalar_select 0, %s5, %s3
  $region1: #{tpu_custom_call.1} parent=0
    #allocation2 [shape = 'u8[16384]{0}', space=vmem, size = 0x4000, scoped, tag = 'input window, operand 0']
    #allocation3 [shape = 's32[2]{0}', space=sflag, size = 0x8, scoped, tag = 'scoped memory for tpu_custom_call.1']
    #allocation4 [shape = 's32[2]{0}', space=sflag, size = 0x8, scoped, tag = 'scoped memory for tpu_custom_call.1']
    #allocation5 [shape = 'u8[65536]{0}', space=vmem, size = 0x10000, scoped, tag = 'input window, operand 1, single buffered']
    #allocation6 [shape = 's32[1]{0}', space=sflag, size = 0x4, scoped, tag = 'scoped memory for tpu_custom_call.1']
    #allocation7 [shape = 'u8[16384]{0}', space=vmem, size = 0x4000, scoped, tag = 'output window, operand 0']
    %7 = vsyncpa [#allocation3], 0
    %s8 = scalar_lea.sflag [#allocation3], 1
    %9 = vsyncpa %s8, 0
    %10 = vsyncpa [#allocation6], 0
    %11 = vsyncpa [#allocation4], 0
    %s12 = scalar_lea.sflag [#allocation4], 1
    %13 = vsyncpa %s12, 0
    loop: start=0, step=1, limit=4
    $region2: #{tpu_custom_call.1} parent=1 // loop_pre_header
      _
    $region3: #{tpu_custom_call.1} parent=1 // loop_header
      %s15 = sphi 0, %s19
      %p16 = scmp.ge.s32.totalorder %s15, 4
      %s25 = sphi 0, %s27
      %s28 = sphi 0, %s25
      %s29 = sphi 0, %s28
      %s45 = sphi 0, %s29
      %s49 = sphi 0, %s49
      %s51 = sphi 0, %s49
      %s52 = sphi 0, %s51
      %s66 = sphi 0, %s52
      %s72 = sphi 0, %s74
      %s75 = sphi 0, %s72
      %s76 = sphi 0, %s75
      %s92 = sphi 0, %s76
    $region4: #{tpu_custom_call.1} parent=1 // loop_header_branch
      %18 = sbr.rel (%p16) target = $region8
    $region5: #{tpu_custom_call.1} parent=1 // loop_body
      %s20 = ssub.s32 %s15, 1
      %s21 = ssub.s32 %s15, 2
      %s22 = sadd.s32 %s15, 1
      %s23 = ssub.s32 %s15, %s22
      %p24 = scmp.eq.s32.totalorder %s23, 0
      %s26 = sadd.s32 %s25, 1
      %s27 = scalar_select %p24, %s25, %s26
      %p30 = pneg %p24
      %p31 = scmp.eq.s32.totalorder %s15, 1
      %p32 = por %p30, %p31
      %p33 = scmp.ne.s32.totalorder %s25, %s28
      %p34 = scmp.eq.s32.totalorder %s15, 0
      %p35 = por %p33, %p34
      %p36 = scmp.ne.s32.totalorder %s25, %s28
      %p37 = scmp.eq.s32.totalorder %s20, 1
      %p38 = por %p36, %p37
      %p39 = scmp.ne.s32.totalorder %s28, %s29
      %p40 = scmp.eq.s32.totalorder %s20, 0
      %p41 = por %p39, %p40
      %p42 = scmp.ne.s32.totalorder %s28, %s29
      %p43 = scmp.eq.s32.totalorder %s21, 1
      %p44 = por %p42, %p43
      %p46 = scmp.ne.s32.totalorder %s29, %s45
      %p47 = scmp.eq.s32.totalorder %s21, 0
      %p48 = por %p46, %p47
      %s50 = sadd.s32 %s49, 1
      %p53 = scmp.eq.s32.totalorder %s15, 1
      %p54 = scmp.ne.s32.totalorder %s49, %s51
      %p55 = scmp.eq.s32.totalorder %s15, 0
      %p56 = por %p54, %p55
      %p57 = scmp.ne.s32.totalorder %s49, %s51
      %p58 = scmp.eq.s32.totalorder %s20, 1
      %p59 = por %p57, %p58
      %p60 = scmp.ne.s32.totalorder %s51, %s52
      %p61 = scmp.eq.s32.totalorder %s20, 0
      %p62 = por %p60, %p61
      %p63 = scmp.ne.s32.totalorder %s51, %s52
      %p64 = scmp.eq.s32.totalorder %s21, 1
      %p65 = por %p63, %p64
      %p67 = scmp.ne.s32.totalorder %s52, %s66
      %p68 = scmp.eq.s32.totalorder %s21, 0
      %p69 = por %p67, %p68
      %s70 = ssub.s32 %s15, %s22
      %p71 = scmp.eq.s32.totalorder %s70, 0
      %s73 = sadd.s32 %s72, 1
      %s74 = scalar_select %p71, %s72, %s73
      %p77 = pneg %p71
      %p78 = scmp.eq.s32.totalorder %s15, 1
      %p79 = por %p77, %p78
      %p80 = scmp.ne.s32.totalorder %s72, %s75
      %p81 = scmp.eq.s32.totalorder %s15, 0
      %p82 = por %p80, %p81
      %p83 = scmp.ne.s32.totalorder %s72, %s75
      %p84 = scmp.eq.s32.totalorder %s20, 1
      %p85 = por %p83, %p84
      %p86 = scmp.ne.s32.totalorder %s75, %s76
      %p87 = scmp.eq.s32.totalorder %s20, 0
      %p88 = por %p86, %p87
      %p89 = scmp.ne.s32.totalorder %s75, %s76
      %p90 = scmp.eq.s32.totalorder %s21, 1
      %p91 = por %p89, %p90
      %p93 = scmp.ne.s32.totalorder %s76, %s92
      %p94 = scmp.eq.s32.totalorder %s21, 0
      %p95 = por %p93, %p94
      %p96 = scmp.le.s32.totalorder 1, %s15
      %p97 = scmp.lt.s32.totalorder %s15, 3
      %p98 = pnand %p96, %p97
      %p99 = pneg %p98
      // Predicated region
      $region9: #{tpu_custom_call.1} parent=5 // pred_check
        _
      $region10: #{tpu_custom_call.1} parent=5 // pred_check_branch
        %101 = sbr.rel (%p98) target = $region12
      $region11: #{tpu_custom_call.1} parent=5 // pred_region
        %s102 = ssub.s32 %s15, 1
        // Predicated region
        $region13: #{tpu_custom_call.1} parent=11 // pred_check
          %p103 = pneg %p62
        $region14: #{tpu_custom_call.1} parent=11 // pred_check_branch
          %105 = sbr.rel (%p103) target = $region16
        $region15: #{tpu_custom_call.1} parent=11 // pred_region
          %s107 = ssub.s32 2048, 2048
          %108 = vsyncadd [#allocation6], %s107
          %s109 = sshll.u32 [#allocation5], 4
          %s110 = int_to_ptr.vmem [resolvable:$true] %s109
          %115 = dma.hbm_to_vmem [thread:$0]  %s1, 2048, %s110, [#allocation6], 64, 64, 4
        $region16: #{tpu_custom_call.1} parent=11 // pred_fallthru
          _
      $region12: #{tpu_custom_call.1} parent=5 // pred_fallthru
        _
      %p116 = scmp.lt.s32.totalorder %s15, 2
      // Predicated region
      $region17: #{tpu_custom_call.1} parent=5 // pred_check
        %p117 = pneg %p116
      $region18: #{tpu_custom_call.1} parent=5 // pred_check_branch
        %119 = sbr.rel (%p117) target = $region20
      $region19: #{tpu_custom_call.1} parent=5 // pred_region
        // Predicated region
        $region21: #{tpu_custom_call.1} parent=19 // pred_check
          %p120 = pneg %p35
        $region22: #{tpu_custom_call.1} parent=19 // pred_check_branch
          %122 = sbr.rel (%p120) target = $region24
        $region23: #{tpu_custom_call.1} parent=19 // pred_region
          %s123 = sand.u32 %s25, 1
          %s124 = scalar_lea.sflag [#allocation3], %s123
          %s125 = sand.u32 %s25, 1
          %s126 = smul.addr %s125, 16
          %s127 = scalar_lea.vmem [#allocation2], %s126
          %s128 = smul.u32 2, %s15
          %s130 = ssub.s32 256, 256
          %131 = vsyncadd %s124, %s130
          %s132 = smul.addr %s128, 2
          %s133 = smul.addr %s132, 64
          %s134 = scalar_lea.hbm %s0, %s133
          %s135 = sshll.u32 %s127, 4
          %s136 = int_to_ptr.vmem [resolvable:$true] %s135
          %141 = dma.hbm_to_vmem [thread:$0]  %s134, 256, %s136, %s124, 128, 128, 8
        $region24: #{tpu_custom_call.1} parent=19 // pred_fallthru
          _
      $region20: #{tpu_custom_call.1} parent=5 // pred_fallthru
        _
      %p142 = scmp.le.s32.totalorder 1, %s15
      %p143 = scmp.lt.s32.totalorder %s15, 3
      %p144 = pnand %p142, %p143
      %p145 = pneg %p144
      // Predicated region
      $region25: #{tpu_custom_call.1} parent=5 // pred_check
        _
      $region26: #{tpu_custom_call.1} parent=5 // pred_check_branch
        %147 = sbr.rel (%p144) target = $region28
      $region27: #{tpu_custom_call.1} parent=5 // pred_region
        %s148 = ssub.s32 %s15, 1
        %s149 = sand.u32 %s28, 1
        %s150 = scalar_lea.sflag [#allocation3], %s149
        %s151 = sand.u32 %s28, 1
        %s152 = smul.addr %s151, 16
        %s153 = scalar_lea.vmem [#allocation2], %s152
        // Predicated region
        $region29: #{tpu_custom_call.1} parent=27 // pred_check
          %p154 = pneg %p41
        $region30: #{tpu_custom_call.1} parent=27 // pred_check_branch
          %156 = sbr.rel (%p154) target = $region32
        $region31: #{tpu_custom_call.1} parent=27 // pred_region
          %157 = dma.done %s150, 256
        $region32: #{tpu_custom_call.1} parent=27 // pred_fallthru
          _
        // Predicated region
        $region33: #{tpu_custom_call.1} parent=27 // pred_check
          %p158 = pneg %p62
        $region34: #{tpu_custom_call.1} parent=27 // pred_check_branch
          %160 = sbr.rel (%p158) target = $region36
        $region35: #{tpu_custom_call.1} parent=27 // pred_region
          %161 = dma.done [#allocation6], 2048
        $region36: #{tpu_custom_call.1} parent=27 // pred_fallthru
          _
        %s162 = sand.u32 %s28, 1
        %s163 = scalar_lea.sflag [#allocation3], %s162
        %s164 = sand.u32 %s28, 1
        %s165 = smul.addr %s164, 16
        %s166 = scalar_lea.vmem [#allocation2], %s165
        %p167 = pneg %p41
        %p168 = pneg %p38
        %p169 = pneg %p62
        %p170 = pneg %p59
        %p171 = pneg %p88
        %p172 = pneg %p85
        %s173 = sand.u32 %s75, 1
        %s174 = scalar_lea.sflag [#allocation4], %s173
        %s175 = sand.u32 %s75, 1
        %s176 = smul.addr %s175, 16
        %s177 = scalar_lea.vmem [#allocation7], %s176
        %s178 = smul.u32 2, %s20
        %s179 = smul.u32 2, %s20
        %v181 = vld [vmem:[%s153] sm:$0xff]
        %v182 = vld [vmem:[%s153 + $0x8] sm:$0xff]
        %v183 = vld [vmem:[#allocation5] sm:$0xf]
        %v184 = vld [vmem:[#allocation5 + $0x4] sm:$0xf]
        %v185 = vld [vmem:[#allocation5 + $0x8] sm:$0xf]
        %v186 = vld [vmem:[#allocation5 + $0xc] sm:$0xf]
        %v187 = vld [vmem:[#allocation5 + $0x10] sm:$0xf]
        %v188 = vld [vmem:[#allocation5 + $0x14] sm:$0xf]
        %v189 = vld [vmem:[#allocation5 + $0x18] sm:$0xf]
        %v190 = vld [vmem:[#allocation5 + $0x1c] sm:$0xf]
        %v191 = vld [vmem:[#allocation5 + $0x20] sm:$0xf]
        %v192 = vld [vmem:[#allocation5 + $0x24] sm:$0xf]
        %v193 = vld [vmem:[#allocation5 + $0x28] sm:$0xf]
        %v194 = vld [vmem:[#allocation5 + $0x2c] sm:$0xf]
        %v195 = vld [vmem:[#allocation5 + $0x30] sm:$0xf]
        %v196 = vld [vmem:[#allocation5 + $0x34] sm:$0xf]
        %v197 = vld [vmem:[#allocation5 + $0x38] sm:$0xf]
        %v198 = vld [vmem:[#allocation5 + $0x3c] sm:$0xf]
        %v199 = vld [vmem:[#allocation5 + $0x40] sm:$0xf]
        %v200 = vld [vmem:[#allocation5 + $0x44] sm:$0xf]
        %v201 = vld [vmem:[#allocation5 + $0x48] sm:$0xf]
        %v202 = vld [vmem:[#allocation5 + $0x4c] sm:$0xf]
        %v203 = vld [vmem:[#allocation5 + $0x50] sm:$0xf]
        %v204 = vld [vmem:[#allocation5 + $0x54] sm:$0xf]
        %v205 = vld [vmem:[#allocation5 + $0x58] sm:$0xf]
        %v206 = vld [vmem:[#allocation5 + $0x5c] sm:$0xf]
        %v207 = vld [vmem:[#allocation5 + $0x60] sm:$0xf]
        %v208 = vld [vmem:[#allocation5 + $0x64] sm:$0xf]
        %v209 = vld [vmem:[#allocation5 + $0x68] sm:$0xf]
        %v210 = vld [vmem:[#allocation5 + $0x6c] sm:$0xf]
        %v211 = vld [vmem:[#allocation5 + $0x70] sm:$0xf]
        %v212 = vld [vmem:[#allocation5 + $0x74] sm:$0xf]
        %v213 = vld [vmem:[#allocation5 + $0x78] sm:$0xf]
        %v214 = vld [vmem:[#allocation5 + $0x7c] sm:$0xf]
        %v217 = vunpack.c.l.b16 %v181
        %v218 = vunpack.c.h.b16 %v181
        %v219 = vunpack.c.l.b16 %v182
        %v220 = vunpack.c.h.b16 %v182
        %v221 = vpack.c.b16 %v219, %v217
        %v222 = vpack.c.b16 %v220, %v218
        %v257 = vunpack.c.l.b16 %v183
        %v258 = vunpack.c.l.b16 %v184
        %v259 = vunpack.c.l.b16 %v185
        %v260 = vunpack.c.l.b16 %v186
        %v261 = vunpack.c.l.b16 %v187
        %v262 = vunpack.c.l.b16 %v188
        %v263 = vunpack.c.l.b16 %v189
        %v264 = vunpack.c.l.b16 %v190
        %v265 = vunpack.c.l.b16 %v191
        %v266 = vunpack.c.l.b16 %v192
        %v267 = vunpack.c.l.b16 %v193
        %v268 = vunpack.c.l.b16 %v194
        %v269 = vunpack.c.l.b16 %v195
        %v270 = vunpack.c.l.b16 %v196
        %v271 = vunpack.c.l.b16 %v197
        %v272 = vunpack.c.l.b16 %v198
        %v273 = vunpack.c.l.b16 %v199
        %v274 = vunpack.c.l.b16 %v200
        %v275 = vunpack.c.l.b16 %v201
        %v276 = vunpack.c.l.b16 %v202
        %v277 = vunpack.c.l.b16 %v203
        %v278 = vunpack.c.l.b16 %v204
        %v279 = vunpack.c.l.b16 %v205
        %v280 = vunpack.c.l.b16 %v206
        %v281 = vunpack.c.l.b16 %v207
        %v282 = vunpack.c.l.b16 %v208
        %v283 = vunpack.c.l.b16 %v209
        %v284 = vunpack.c.l.b16 %v210
        %v285 = vunpack.c.l.b16 %v211
        %v286 = vunpack.c.l.b16 %v212
        %v287 = vunpack.c.l.b16 %v213
        %v288 = vunpack.c.l.b16 %v214
        %v289 = vpack.c.b16 %v258, %v257
        %v290 = vpack.c.b16 %v260, %v259
        %v291 = vpack.c.b16 %v262, %v261
        %v292 = vpack.c.b16 %v264, %v263
        %v293 = vpack.c.b16 %v266, %v265
        %v294 = vpack.c.b16 %v268, %v267
        %v295 = vpack.c.b16 %v270, %v269
        %v296 = vpack.c.b16 %v272, %v271
        %v297 = vpack.c.b16 %v274, %v273
        %v298 = vpack.c.b16 %v276, %v275
        %v299 = vpack.c.b16 %v278, %v277
        %v300 = vpack.c.b16 %v280, %v279
        %v301 = vpack.c.b16 %v282, %v281
        %v302 = vpack.c.b16 %v284, %v283
        %v303 = vpack.c.b16 %v286, %v285
        %v304 = vpack.c.b16 %v288, %v287
        %321 = vmatprep.subr.bf16.mxu0 0
        %322 = vmatpush1.bf16.msra.mxu0 %v289
        %323 = vmatprep.subr.bf16.mxu0 0
        %324 = vmatpush1.bf16.msra.mxu0 %v290
        %325 = vmatprep.subr.bf16.mxu0 0
        %326 = vmatpush1.bf16.msra.mxu0 %v291
        %327 = vmatprep.subr.bf16.mxu0 0
        %328 = vmatpush1.bf16.msra.mxu0 %v292
        %329 = vmatprep.subr.bf16.mxu0 0
        %330 = vmatpush1.bf16.msra.mxu0 %v293
        %331 = vmatprep.subr.bf16.mxu0 0
        %332 = vmatpush1.bf16.msra.mxu0 %v294
        %333 = vmatprep.subr.bf16.mxu0 0
        %334 = vmatpush1.bf16.msra.mxu0 %v295
        %335 = vmatprep.subr.bf16.mxu0 0
        %336 = vmatpush1.bf16.msra.mxu0 %v296
        %337 = vmatprep.subr.bf16.mxu0 0
        %338 = vmatpush1.bf16.msra.mxu0 %v297
        %339 = vmatprep.subr.bf16.mxu0 0
        %340 = vmatpush1.bf16.msra.mxu0 %v298
        %341 = vmatprep.subr.bf16.mxu0 0
        %342 = vmatpush1.bf16.msra.mxu0 %v299
        %343 = vmatprep.subr.bf16.mxu0 0
        %344 = vmatpush1.bf16.msra.mxu0 %v300
        %345 = vmatprep.subr.bf16.mxu0 0
        %346 = vmatpush1.bf16.msra.mxu0 %v301
        %347 = vmatprep.subr.bf16.mxu0 0
        %348 = vmatpush1.bf16.msra.mxu0 %v302
        %349 = vmatprep.subr.bf16.mxu0 0
        %350 = vmatpush1.bf16.msra.mxu0 %v303
        %351 = vmatprep.subr.bf16.mxu0 0
        %352 = vmatpush1.bf16.msra.mxu0 %v304
        %353 = vmatprep.mubr.bf16.mxu0 %v222
        %354 = vmatmul.mubr.bf16.gmra.mrb[0].mxu0 %v221
        %v355 = vpop.f32.mrb[0].mxu0
        %v356 = vadd.f32 0.0, %v355
        %v357 = vpop.f32.mrb[0].mxu0
        %v358 = vpop.f32.mrb[0].mxu0
        %v359 = vadd.f32 0.0, %v358
        %v360 = vpop.f32.mrb[0].mxu0
        %361 = vdwg.mxu0
        %v362 = vmax.f32 %v356, 0.0
        %v363 = vmax.f32 %v359, 0.0
        %364 = vst [vmem:[%s177] sm:$0xff] %v362
        %365 = vst [vmem:[%s177 + $0x8] sm:$0xff] %v363
        %s366 = sand.u32 %s75, 1
        %s367 = scalar_lea.sflag [#allocation4], %s366
        %s368 = sand.u32 %s75, 1
        %s369 = smul.addr %s368, 16
        %s370 = scalar_lea.vmem [#allocation7], %s369
        // Predicated region
        $region37: #{tpu_custom_call.1} parent=27 // pred_check
          %p371 = pneg %p85
        $region38: #{tpu_custom_call.1} parent=27 // pred_check_branch
          %373 = sbr.rel (%p371) target = $region40
        $region39: #{tpu_custom_call.1} parent=27 // pred_region
          %s374 = smul.u32 2, %s20
          %s376 = ssub.s32 256, 256
          %377 = vsyncadd %s367, %s376
          %s378 = smul.addr %s374, 128
          %s379 = scalar_lea.hbm %s2, %s378
          %s380 = sshll.u32 %s370, 4
          %s381 = int_to_ptr.vmem [resolvable:$true] %s380
          %386 = dma.vmem_to_hbm [thread:$0]  %s381, 256, %s379, %s367, 128, 128, 8
        $region40: #{tpu_custom_call.1} parent=27 // pred_fallthru
          _
      $region28: #{tpu_custom_call.1} parent=5 // pred_fallthru
        _
      %p387 = scmp.le.s32.totalorder 2, %s15
      // Predicated region
      $region41: #{tpu_custom_call.1} parent=5 // pred_check
        %p388 = pneg %p387
      $region42: #{tpu_custom_call.1} parent=5 // pred_check_branch
        %390 = sbr.rel (%p388) target = $region44
      $region43: #{tpu_custom_call.1} parent=5 // pred_region
        %s391 = ssub.s32 %s15, 2
        // Predicated region
        $region45: #{tpu_custom_call.1} parent=43 // pred_check
          %p392 = pneg %p91
        $region46: #{tpu_custom_call.1} parent=43 // pred_check_branch
          %394 = sbr.rel (%p392) target = $region48
        $region47: #{tpu_custom_call.1} parent=43 // pred_region
          %s395 = sand.u32 %s76, 1
          %s396 = scalar_lea.sflag [#allocation4], %s395
          %s397 = sand.u32 %s76, 1
          %s398 = smul.addr %s397, 16
          %s399 = scalar_lea.vmem [#allocation7], %s398
          %400 = dma.done %s396, 256
        $region48: #{tpu_custom_call.1} parent=43 // pred_fallthru
          _
      $region44: #{tpu_custom_call.1} parent=5 // pred_fallthru
        _
    $region6: #{tpu_custom_call.1} parent=1 // loop_footer
      %s19 = sadd.s32 1, %s15
    $region7: #{tpu_custom_call.1} parent=1 // loop_footer_branch
      %14 = sbr.rel target = $region3
    $region8: #{tpu_custom_call.1} parent=1 // loop_exit
      _
    %401 = vsyncpa [#allocation3], 1
    %s402 = scalar_lea.sflag [#allocation3], 1
    %403 = vsyncpa %s402, 1
    %404 = vsyncpa [#allocation6], 1
    %405 = vsyncpa [#allocation4], 1
    %s406 = scalar_lea.sflag [#allocation4], 1
    %407 = vsyncpa %s406, 1

</llo_original>
